<compile_context>
chip_gen: v5e
topology: v5e:2x2
jax: 0.10.0
libtpu: 0.0.40
codegen_flags: <defaults>
</compile_context>

<pallas_src>
import functools

import jax
import jax.numpy as jnp
from jax.experimental import pallas as pl
from jax.experimental.pallas import tpu as pltpu

LANE = 128     # vreg lane width — pad feature dims to this
SUBLANE = 8    # vreg sublane count — pad batch to a multiple of this
TM_MAX = 512   # max batch-tile rows per grid step (multiple of 8)


def _round_up(x, m):
    return (x + m - 1) // m * m


def _mlp_kernel(*refs, num_layers):
    """refs = (x, w0, b0, w1, b1, ..., w{L-1}, b{L-1}, out).

    y = relu(...relu(x @ w0 + b0)...) @ w{L-1} + b{L-1}
    Operands (x, W) are in compute dtype (bf16 by default); accumulation, bias
    add and ReLU are f32; hidden activations are cast back to the operand dtype
    only to feed the next MXU pass. Everything stays in vregs/VMEM.
    """
    x_ref = refs[0]
    o_ref = refs[-1]
    op_dtype = x_ref.dtype
    a = x_ref[...]
    for i in range(num_layers):
        w_ref = refs[1 + 2 * i]
        b_ref = refs[2 + 2 * i]
        acc = jnp.dot(a, w_ref[...], preferred_element_type=jnp.float32)
        acc = acc + b_ref[...]          # f32 bias, implicit (TM,out)+(1,out) broadcast
        if i < num_layers - 1:
            a = jnp.maximum(acc, 0.0).astype(op_dtype)  # clamp(min=0) hidden layers only
        else:
            a = acc
    o_ref[...] = a.astype(o_ref.dtype)


def _net_relu_forward(x, flat_params, *, dims_pad, in_dim, out_dim, num_layers,
                      compute_dtype, out_dtype, tm_max):
    n = x.shape[0]
    in_pad, out_pad = dims_pad[0], dims_pad[-1]

    # Batch tiling: TM <= tm_max rows per grid step, TM a multiple of 8.
    n_pad8 = _round_up(max(n, SUBLANE), SUBLANE)
    tm = min(tm_max, n_pad8)
    n_pad = _round_up(n_pad8, tm)
    grid = (n_pad // tm,)

    # Pad/cast the activation only (parameters were padded once at init).
    xc = x.astype(compute_dtype)
    if (n_pad, in_pad) != (n, in_dim):
        xc = jnp.pad(xc, ((0, n_pad - n), (0, in_pad - in_dim)))

    # BlockSpecs: x/out stream over the batch axis; weights/biases use a
    # constant index_map so they are DMA'd once and stay VMEM-resident.
    x_spec = pl.BlockSpec((tm, in_pad), lambda i: (i, 0))
    param_specs = []
    for li in range(num_layers):
        param_specs.append(
            pl.BlockSpec((dims_pad[li], dims_pad[li + 1]), lambda i: (0, 0)))
        param_specs.append(
            pl.BlockSpec((1, dims_pad[li + 1]), lambda i: (0, 0)))
    out_spec = pl.BlockSpec((tm, out_pad), lambda i: (i, 0))

    op_isize = jnp.dtype(compute_dtype).itemsize
    out_isize = jnp.dtype(out_dtype).itemsize
    param_bytes = sum(int(p.size) * p.dtype.itemsize for p in flat_params)

    # Advisory cost estimate so XLA can overlap surrounding ops with the call.
    flops = 2 * sum(n_pad * dims_pad[l] * dims_pad[l + 1] for l in range(num_layers))
    bytes_accessed = (n_pad * in_pad * op_isize + param_bytes
                      + n_pad * out_pad * out_isize)
    cost = pl.CostEstimate(flops=flops, transcendentals=0,
                           bytes_accessed=bytes_accessed)

    # VMEM budget: resident params (constant-index blocks are fetched once;
    # the 2x below just covers their buffer allocation) + double-buffered
    # activation tiles + headroom.  Clamped to stay safe on v7x's 64 MiB VMEM
    # while overriding v5e's 16 MiB scoped default.
    act_bytes = tm * in_pad * op_isize + tm * out_pad * out_isize
    vmem_needed = 2 * (param_bytes + act_bytes) + (2 << 20)
    vmem_limit = int(min(max(vmem_needed, 4 << 20), 48 << 20))

    kernel = functools.partial(_mlp_kernel, num_layers=num_layers)
    out_padded = pl.pallas_call(
        kernel,
        out_shape=jax.ShapeDtypeStruct((n_pad, out_pad), out_dtype),
        grid=grid,
        in_specs=[x_spec] + param_specs,
        out_specs=out_spec,
        compiler_params=pltpu.CompilerParams(
            dimension_semantics=("parallel",),       # shard batch tiles across TCs (v7x)
            vmem_limit_bytes=vmem_limit),
        cost_estimate=cost,
    )(xc, *flat_params)

    # Cheap tail slice only when padding was actually added (static under jit).
    if n_pad != n or out_pad != out_dim:
        out_padded = out_padded[:n, :out_dim]
    return out_padded


class NetReLUPallas:
    """NetReLU forward with parameters pre-padded/cast once at construction."""

    def __init__(self, params, *, compute_dtype=jnp.bfloat16,
                 out_dtype=jnp.float32, tm_max=TM_MAX):
        self.num_layers = len(params)
        self.in_dim = params[0][0].shape[0]
        self.out_dim = params[-1][0].shape[1]
        dims = [self.in_dim] + [w.shape[1] for w, _ in params]
        self.dims_pad = tuple(_round_up(d, LANE) for d in dims)

        # One-time padding + cast (hoisted out of the per-call hot path).
        # Zero padding guarantees padded lanes contribute exactly 0 downstream.
        flat = []
        for li, (w, b) in enumerate(params):
            wi, wo = w.shape
            wp = jnp.zeros((self.dims_pad[li], self.dims_pad[li + 1]), compute_dtype)
            wp = wp.at[:wi, :wo].set(w.astype(compute_dtype))
            bp = jnp.zeros((1, self.dims_pad[li + 1]), jnp.float32)
            bp = bp.at[:, :wo].set(b.astype(jnp.float32))
            flat += [wp, bp]
        self.flat_params = tuple(jax.device_put(p) for p in flat)

        self._fwd = jax.jit(functools.partial(
            _net_relu_forward,
            dims_pad=self.dims_pad,
            in_dim=self.in_dim, out_dim=self.out_dim,
            num_layers=self.num_layers,
            compute_dtype=compute_dtype, out_dtype=out_dtype, tm_max=tm_max))

    def __call__(self, x):
        return self._fwd(x, self.flat_params)


def init_params(key, sizes, dtype=jnp.float32):
    """Deterministic init matching nn.Linear shapes: W (in,out), b (1,out)."""
    params = []
    for in_dim, out_dim in zip(sizes[:-1], sizes[1:]):
        key, kw, kb = jax.random.split(key, 3)
        bound = 1.0 / jnp.sqrt(in_dim)
        w = jax.random.uniform(kw, (in_dim, out_dim), dtype, -bound, bound)
        b = jax.random.uniform(kb, (1, out_dim), dtype, -bound, bound)
        params.append((w, b))
    return params


def net_relu_reference(x, params, op_dtype=jnp.float32):
    """Pure-JAX reference with the same operand dtype / f32 accumulation."""
    a = x.astype(op_dtype)
    for w, b in params[:-1]:
        acc = jnp.dot(a, w.astype(op_dtype), preferred_element_type=jnp.float32)
        a = jnp.maximum(acc + b.astype(jnp.float32), 0.0).astype(op_dtype)
    w, b = params[-1]
    acc = jnp.dot(a, w.astype(op_dtype), preferred_element_type=jnp.float32)
    return acc + b.astype(jnp.float32)


if __name__ == "__main__":
    key = jax.random.PRNGKey(0)
    sizes = [32, 64, 48, 16]   # sizes[0]=in_dim, sizes[-1]=out_dim
    batch = 100                # train_n in the tutorial

    key, kx, kp = jax.random.split(key, 3)
    x = jax.random.normal(kx, (batch, sizes[0]), jnp.float32)
    params = init_params(kp, sizes)

    # Exact f32 path.
    net_f32 = NetReLUPallas(params, compute_dtype=jnp.float32)
    out_f32 = jax.block_until_ready(net_f32(x))
    ref_f32 = net_relu_reference(x, params, op_dtype=jnp.float32)
    assert out_f32.shape == (batch, sizes[-1])
    assert jnp.allclose(out_f32, ref_f32, atol=1e-5, rtol=1e-5)

    # MXU-native bf16-operand path (f32 accumulation / bias / ReLU).
    net_bf16 = NetReLUPallas(params, compute_dtype=jnp.bfloat16)
    out_bf16 = jax.block_until_ready(net_bf16(x))
    ref_bf16 = net_relu_reference(x, params, op_dtype=jnp.bfloat16)
    assert out_bf16.shape == (batch, sizes[-1])
    assert jnp.allclose(out_bf16, ref_bf16, atol=5e-3, rtol=5e-3)

    print("KERNEL_OK")
</pallas_src>

<mosaic_0001>
module attributes {stable_mosaic.version = 11 : i64} {
  func.func @_mlp_kernel(%arg0: i32, %arg1: memref<104x128xf32, #tpu.memory_space<vmem>>, %arg2: memref<128x128xf32, #tpu.memory_space<vmem>>, %arg3: memref<1x128xf32, #tpu.memory_space<vmem>>, %arg4: memref<128x128xf32, #tpu.memory_space<vmem>>, %arg5: memref<1x128xf32, #tpu.memory_space<vmem>>, %arg6: memref<128x128xf32, #tpu.memory_space<vmem>>, %arg7: memref<1x128xf32, #tpu.memory_space<vmem>>, %arg8: memref<104x128xf32, #tpu.memory_space<vmem>>) attributes {dimension_semantics = [#tpu.dimension_semantics<parallel>], iteration_bounds = array<i64: 1>, scalar_prefetch = 0 : i64, scratch_operands = 0 : i64, tpu.core_type = #tpu.core_type<tc>, window_params = [{transform_indices = @transform_0, window_bounds = array<i64: 104, 128>}, {pipeline_mode = #tpu.pipeline_mode<synchronous>, transform_indices = @transform_1, window_bounds = array<i64: 128, 128>}, {pipeline_mode = #tpu.pipeline_mode<synchronous>, transform_indices = @transform_2, window_bounds = array<i64: 1, 128>}, {pipeline_mode = #tpu.pipeline_mode<synchronous>, transform_indices = @transform_3, window_bounds = array<i64: 128, 128>}, {pipeline_mode = #tpu.pipeline_mode<synchronous>, transform_indices = @transform_4, window_bounds = array<i64: 1, 128>}, {pipeline_mode = #tpu.pipeline_mode<synchronous>, transform_indices = @transform_5, window_bounds = array<i64: 128, 128>}, {pipeline_mode = #tpu.pipeline_mode<synchronous>, transform_indices = @transform_6, window_bounds = array<i64: 1, 128>}, {transform_indices = @transform_7, window_bounds = array<i64: 104, 128>}]} {
    %c0 = arith.constant 0 : index
    %c0_0 = arith.constant 0 : index
    %0 = vector.load %arg1[%c0, %c0_0] : memref<104x128xf32, #tpu.memory_space<vmem>>, vector<104x128xf32>
    %c0_1 = arith.constant 0 : index
    %c0_2 = arith.constant 0 : index
    %1 = vector.load %arg2[%c0_1, %c0_2] : memref<128x128xf32, #tpu.memory_space<vmem>>, vector<128x128xf32>
    %cst = arith.constant dense<0.000000e+00> : vector<104x128xf32>
    %2 = tpu.matmul %0, %1, %cst {dimension_numbers = #tpu.dot_dimension_numbers<[1], [0], [0], [1], [0, 0, 1, 1], [], []>} : vector<104x128xf32>, vector<128x128xf32>, vector<104x128xf32> -> vector<104x128xf32>
    %c0_3 = arith.constant 0 : index
    %c0_4 = arith.constant 0 : index
    %3 = vector.load %arg3[%c0_3, %c0_4] : memref<1x128xf32, #tpu.memory_space<vmem>>, vector<1x128xf32>
    %4 = vector.broadcast %3 : vector<1x128xf32> to vector<104x128xf32>
    %5 = arith.addf %2, %4 : vector<104x128xf32>
    %cst_5 = arith.constant 0.000000e+00 : f32
    %6 = vector.broadcast %cst_5 : f32 to vector<104x128xf32>
    %7 = arith.maximumf %5, %6 : vector<104x128xf32>
    %c0_6 = arith.constant 0 : index
    %c0_7 = arith.constant 0 : index
    %8 = vector.load %arg4[%c0_6, %c0_7] : memref<128x128xf32, #tpu.memory_space<vmem>>, vector<128x128xf32>
    %cst_8 = arith.constant dense<0.000000e+00> : vector<104x128xf32>
    %9 = tpu.matmul %7, %8, %cst_8 {dimension_numbers = #tpu.dot_dimension_numbers<[1], [0], [0], [1], [0, 0, 1, 1], [], []>} : vector<104x128xf32>, vector<128x128xf32>, vector<104x128xf32> -> vector<104x128xf32>
    %c0_9 = arith.constant 0 : index
    %c0_10 = arith.constant 0 : index
    %10 = vector.load %arg5[%c0_9, %c0_10] : memref<1x128xf32, #tpu.memory_space<vmem>>, vector<1x128xf32>
    %11 = vector.broadcast %10 : vector<1x128xf32> to vector<104x128xf32>
    %12 = arith.addf %9, %11 : vector<104x128xf32>
    %cst_11 = arith.constant 0.000000e+00 : f32
    %13 = vector.broadcast %cst_11 : f32 to vector<104x128xf32>
    %14 = arith.maximumf %12, %13 : vector<104x128xf32>
    %c0_12 = arith.constant 0 : index
    %c0_13 = arith.constant 0 : index
    %15 = vector.load %arg6[%c0_12, %c0_13] : memref<128x128xf32, #tpu.memory_space<vmem>>, vector<128x128xf32>
    %cst_14 = arith.constant dense<0.000000e+00> : vector<104x128xf32>
    %16 = tpu.matmul %14, %15, %cst_14 {dimension_numbers = #tpu.dot_dimension_numbers<[1], [0], [0], [1], [0, 0, 1, 1], [], []>} : vector<104x128xf32>, vector<128x128xf32>, vector<104x128xf32> -> vector<104x128xf32>
    %c0_15 = arith.constant 0 : index
    %c0_16 = arith.constant 0 : index
    %17 = vector.load %arg7[%c0_15, %c0_16] : memref<1x128xf32, #tpu.memory_space<vmem>>, vector<1x128xf32>
    %18 = vector.broadcast %17 : vector<1x128xf32> to vector<104x128xf32>
    %19 = arith.addf %16, %18 : vector<104x128xf32>
    %c0_17 = arith.constant 0 : index
    %c0_18 = arith.constant 0 : index
    %20 = vector.load %arg8[%c0_17, %c0_18] : memref<104x128xf32, #tpu.memory_space<vmem>>, vector<104x128xf32>
    tpu.vector_store %arg8[%c0_17, %c0_18], %19 {strides = array<i32>} : memref<104x128xf32, #tpu.memory_space<vmem>>, vector<104x128xf32>,
    return
  }
  func.func @transform_0(%arg0: i32) -> (i32, i32) {
    %c0_i32 = arith.constant 0 : i32
    %c0_i32_0 = arith.constant 0 : i32
    return %arg0, %c0_i32 : i32, i32
  }
  func.func @transform_1(%arg0: i32) -> (i32, i32) {
    %c0_i32 = arith.constant 0 : i32
    %c0_i32_0 = arith.constant 0 : i32
    %c0_i32_1 = arith.constant 0 : i32
    return %c0_i32, %c0_i32_0 : i32, i32
  }
  func.func @transform_2(%arg0: i32) -> (i32, i32) {
    %c0_i32 = arith.constant 0 : i32
    %c0_i32_0 = arith.constant 0 : i32
    %c0_i32_1 = arith.constant 0 : i32
    return %c0_i32, %c0_i32_0 : i32, i32
  }
  func.func @transform_3(%arg0: i32) -> (i32, i32) {
    %c0_i32 = arith.constant 0 : i32
    %c0_i32_0 = arith.constant 0 : i32
    %c0_i32_1 = arith.constant 0 : i32
    return %c0_i32, %c0_i32_0 : i32, i32
  }
  func.func @transform_4(%arg0: i32) -> (i32, i32) {
    %c0_i32 = arith.constant 0 : i32
    %c0_i32_0 = arith.constant 0 : i32
    %c0_i32_1 = arith.constant 0 : i32
    return %c0_i32, %c0_i32_0 : i32, i32
  }
  func.func @transform_5(%arg0: i32) -> (i32, i32) {
    %c0_i32 = arith.constant 0 : i32
    %c0_i32_0 = arith.constant 0 : i32
    %c0_i32_1 = arith.constant 0 : i32
    return %c0_i32, %c0_i32_0 : i32, i32
  }
  func.func @transform_6(%arg0: i32) -> (i32, i32) {
    %c0_i32 = arith.constant 0 : i32
    %c0_i32_0 = arith.constant 0 : i32
    %c0_i32_1 = arith.constant 0 : i32
    return %c0_i32, %c0_i32_0 : i32, i32
  }
  func.func @transform_7(%arg0: i32) -> (i32, i32) {
    %c0_i32 = arith.constant 0 : i32
    %c0_i32_0 = arith.constant 0 : i32
    return %arg0, %c0_i32 : i32, i32
  }
}

</mosaic_0001>

<llo_original>
// kernel: _net_relu_forward.1
$region0: #{_net_relu_forward.1}
  #allocation0 [shape = 'u32[]', space=smem, size = 0x4, offset = 0x4, fixed_abs, tag = 'smem constant byte address 0x4 - core index']
  #allocation1 [shape = 'u32[72,128]{1,0:T(1,128)}', space=vmem, size = 0x9000, scoped, tag = 'internal scratch']
  %s0 = inlined_call_operand.vmem [shape: f32[104,128], index: 0, kind: input, shape index: {}]
  %s1 = inlined_call_operand.vmem [shape: f32[128,128], index: 1, kind: input, shape index: {}]
  %s2 = inlined_call_operand.vmem [shape: f32[1,128], index: 2, kind: input, shape index: {}]
  %s3 = inlined_call_operand.vmem [shape: f32[128,128], index: 3, kind: input, shape index: {}]
  %s4 = inlined_call_operand.vmem [shape: f32[1,128], index: 4, kind: input, shape index: {}]
  %s5 = inlined_call_operand.hbm [shape: f32[128,128], index: 5, kind: input, shape index: {}]
  %s6 = inlined_call_operand.vmem [shape: f32[1,128], index: 6, kind: input, shape index: {}]
  %s7 = inlined_call_operand.vmem [shape: f32[104,128], index: 7, kind: output, shape index: {}]
  %s8 = sld [smem:[#allocation0]]
  $region42: #{_net_relu_forward.1} parent=0
    _
  %s10 = ssub.s32 1, %s8
  %s11 = scalar_select 0, %s10, %s8
  $region1: #{_net_relu_forward.1} parent=0
    #allocation2 [shape = 'u8[65536]{0}', space=vmem, size = 0x10000, scoped, tag = 'input window, operand 5, single buffered']
    #allocation3 [shape = 's32[1]{0}', space=sflag, size = 0x4, scoped, tag = 'scoped memory for _net_relu_forward.1']
    %12 = vsyncpa [#allocation3], 0
    // Predicated region
    $region2: #{_net_relu_forward.1} parent=1 // pred_check
      _
    $region3: #{_net_relu_forward.1} parent=1 // pred_check_branch
      %14 = sbr.rel (0) target = $region5
    $region4: #{_net_relu_forward.1} parent=1 // pred_region
      _
    $region5: #{_net_relu_forward.1} parent=1 // pred_fallthru
      _
    // Predicated region
    $region6: #{_net_relu_forward.1} parent=1 // pred_check
      _
    $region7: #{_net_relu_forward.1} parent=1 // pred_check_branch
      %16 = sbr.rel (0) target = $region9
    $region8: #{_net_relu_forward.1} parent=1 // pred_region
      _
    $region9: #{_net_relu_forward.1} parent=1 // pred_fallthru
      _
    // Predicated region
    $region10: #{_net_relu_forward.1} parent=1 // pred_check
      _
    $region11: #{_net_relu_forward.1} parent=1 // pred_check_branch
      %18 = sbr.rel (0) target = $region13
    $region12: #{_net_relu_forward.1} parent=1 // pred_region
      _
    $region13: #{_net_relu_forward.1} parent=1 // pred_fallthru
      _
    // Predicated region
    $region14: #{_net_relu_forward.1} parent=1 // pred_check
      _
    $region15: #{_net_relu_forward.1} parent=1 // pred_check_branch
      %20 = sbr.rel (0) target = $region17
    $region16: #{_net_relu_forward.1} parent=1 // pred_region
      _
    $region17: #{_net_relu_forward.1} parent=1 // pred_fallthru
      _
    // Predicated region
    $region18: #{_net_relu_forward.1} parent=1 // pred_check
      _
    $region19: #{_net_relu_forward.1} parent=1 // pred_check_branch
      %22 = sbr.rel (0) target = $region21
    $region20: #{_net_relu_forward.1} parent=1 // pred_region
      _
    $region21: #{_net_relu_forward.1} parent=1 // pred_fallthru
      _
    // Predicated region
    $region22: #{_net_relu_forward.1} parent=1 // pred_check
      _
    $region23: #{_net_relu_forward.1} parent=1 // pred_check_branch
      %24 = sbr.rel (0) target = $region25
    $region24: #{_net_relu_forward.1} parent=1 // pred_region
      %26 = vsyncadd [#allocation3], 0
      %s27 = sshll.u32 %s5, 4
      %s28 = int_to_ptr.hbm [resolvable:$true] %s27
      %s29 = sshll.u32 [#allocation2], 4
      %s30 = int_to_ptr.vmem [resolvable:$true] %s29
      %35 = dma.hbm_to_vmem [thread:$0]  %s28, 2048, %s30, [#allocation3], 128, 128, 8
    $region25: #{_net_relu_forward.1} parent=1 // pred_fallthru
      _
    // Predicated region
    $region26: #{_net_relu_forward.1} parent=1 // pred_check
      _
    $region27: #{_net_relu_forward.1} parent=1 // pred_check_branch
      %37 = sbr.rel (0) target = $region29
    $region28: #{_net_relu_forward.1} parent=1 // pred_region
      _
    $region29: #{_net_relu_forward.1} parent=1 // pred_fallthru
      _
    // Predicated region
    $region30: #{_net_relu_forward.1} parent=1 // pred_check
      _
    $region31: #{_net_relu_forward.1} parent=1 // pred_check_branch
      %39 = sbr.rel (0) target = $region33
    $region32: #{_net_relu_forward.1} parent=1 // pred_region
      %41 = dma.done [#allocation3], 2048
    $region33: #{_net_relu_forward.1} parent=1 // pred_fallthru
      _
    %v42 = vld [vmem:[%s0] sm:$0xff]
    %v43 = vld [vmem:[%s0 + $0x8] sm:$0xff]
    %v44 = vld [vmem:[%s0 + $0x10] sm:$0xff]
    %v45 = vld [vmem:[%s0 + $0x18] sm:$0xff]
    %v46 = vld [vmem:[%s0 + $0x20] sm:$0xff]
    %v47 = vld [vmem:[%s0 + $0x28] sm:$0xff]
    %v48 = vld [vmem:[%s0 + $0x30] sm:$0xff]
    %v49 = vld [vmem:[%s0 + $0x38] sm:$0xff]
    %v50 = vld [vmem:[%s0 + $0x40] sm:$0xff]
    %v51 = vld [vmem:[%s0 + $0x48] sm:$0xff]
    %v52 = vld [vmem:[%s0 + $0x50] sm:$0xff]
    %v53 = vld [vmem:[%s0 + $0x58] sm:$0xff]
    %v54 = vld [vmem:[%s0 + $0x60] sm:$0xff]
    %v55 = vld [vmem:[%s1] sm:$0xff]
    %v56 = vld [vmem:[%s1 + $0x8] sm:$0xff]
    %v57 = vld [vmem:[%s1 + $0x10] sm:$0xff]
    %v58 = vld [vmem:[%s1 + $0x18] sm:$0xff]
    %v59 = vld [vmem:[%s1 + $0x20] sm:$0xff]
    %v60 = vld [vmem:[%s1 + $0x28] sm:$0xff]
    %v61 = vld [vmem:[%s1 + $0x30] sm:$0xff]
    %v62 = vld [vmem:[%s1 + $0x38] sm:$0xff]
    %v63 = vld [vmem:[%s1 + $0x40] sm:$0xff]
    %v64 = vld [vmem:[%s1 + $0x48] sm:$0xff]
    %v65 = vld [vmem:[%s1 + $0x50] sm:$0xff]
    %v66 = vld [vmem:[%s1 + $0x58] sm:$0xff]
    %v67 = vld [vmem:[%s1 + $0x60] sm:$0xff]
    %v68 = vld [vmem:[%s1 + $0x68] sm:$0xff]
    %v69 = vld [vmem:[%s1 + $0x70] sm:$0xff]
    %v70 = vld [vmem:[%s1 + $0x78] sm:$0xff]
    %v71 = vld [vmem:[%s2] sm:$0x1]
    %v73 = vperm.slane %v71, 0
    %75 = vmatpush.msra.mxu0 %v70
    %76 = vmatpush.msra.mxu0 %v69
    %77 = vmatpush.msra.mxu0 %v68
    %78 = vmatpush.msra.mxu0 %v67
    %79 = vmatpush.msra.mxu0 %v66
    %80 = vmatpush.msra.mxu0 %v65
    %81 = vmatpush.msra.mxu0 %v64
    %82 = vmatpush.msra.mxu0 %v63
    %83 = vmatpush.msra.mxu0 %v62
    %84 = vmatpush.msra.mxu0 %v61
    %85 = vmatpush.msra.mxu0 %v60
    %86 = vmatpush.msra.mxu0 %v59
    %87 = vmatpush.msra.mxu0 %v58
    %88 = vmatpush.msra.mxu0 %v57
    %89 = vmatpush.msra.mxu0 %v56
    %90 = vmatpush.msra.mxu0 %v55
    %91 = vmatmul.f32.gmra.mxu0 %v42
    %v92 = vpop.f32.mrf.mxu0
    %v93 = vadd.f32 %v73, %v92
    %94 = vmatmul.f32.gmra.mxu0 %v43
    %v95 = vpop.f32.mrf.mxu0
    %v96 = vadd.f32 %v73, %v95
    %97 = vmatmul.f32.gmra.mxu0 %v44
    %v98 = vpop.f32.mrf.mxu0
    %v99 = vadd.f32 %v73, %v98
    %100 = vmatmul.f32.gmra.mxu0 %v45
    %v101 = vpop.f32.mrf.mxu0
    %v102 = vadd.f32 %v73, %v101
    %103 = vmatmul.f32.gmra.mxu0 %v46
    %v104 = vpop.f32.mrf.mxu0
    %v105 = vadd.f32 %v73, %v104
    %106 = vmatmul.f32.gmra.mxu0 %v47
    %v107 = vpop.f32.mrf.mxu0
    %v108 = vadd.f32 %v73, %v107
    %109 = vmatmul.f32.gmra.mxu0 %v48
    %v110 = vpop.f32.mrf.mxu0
    %v111 = vadd.f32 %v73, %v110
    %112 = vmatmul.f32.gmra.mxu0 %v49
    %v113 = vpop.f32.mrf.mxu0
    %v114 = vadd.f32 %v73, %v113
    %115 = vmatmul.f32.gmra.mxu0 %v50
    %v116 = vpop.f32.mrf.mxu0
    %v117 = vadd.f32 %v73, %v116
    %118 = vmatmul.f32.gmra.mxu0 %v51
    %v119 = vpop.f32.mrf.mxu0
    %v120 = vadd.f32 %v73, %v119
    %121 = vmatmul.f32.gmra.mxu0 %v52
    %v122 = vpop.f32.mrf.mxu0
    %v123 = vadd.f32 %v73, %v122
    %124 = vmatmul.f32.gmra.mxu0 %v53
    %v125 = vpop.f32.mrf.mxu0
    %v126 = vadd.f32 %v73, %v125
    %127 = vmatmul.f32.gmra.mxu0 %v54
    %v128 = vpop.f32.mrf.mxu0
    %v129 = vadd.f32 %v73, %v128
    %130 = vdwg.mxu0
    %v131 = vmax.f32 %v93, 0.0
    %v132 = vmax.f32 %v96, 0.0
    %v133 = vmax.f32 %v99, 0.0
    %v134 = vmax.f32 %v102, 0.0
    %v135 = vmax.f32 %v105, 0.0
    %v136 = vmax.f32 %v108, 0.0
    %v137 = vmax.f32 %v111, 0.0
    %v138 = vmax.f32 %v114, 0.0
    %v139 = vmax.f32 %v117, 0.0
    %v140 = vmax.f32 %v120, 0.0
    %v141 = vmax.f32 %v123, 0.0
    %v142 = vmax.f32 %v126, 0.0
    %v143 = vmax.f32 %v129, 0.0
    %v144 = vld [vmem:[%s3] sm:$0xff]
    %v145 = vld [vmem:[%s3 + $0x8] sm:$0xff]
    %v146 = vld [vmem:[%s3 + $0x10] sm:$0xff]
    %v147 = vld [vmem:[%s3 + $0x18] sm:$0xff]
    %v148 = vld [vmem:[%s3 + $0x20] sm:$0xff]
    %v149 = vld [vmem:[%s3 + $0x28] sm:$0xff]
    %v150 = vld [vmem:[%s3 + $0x30] sm:$0xff]
    %v151 = vld [vmem:[%s3 + $0x38] sm:$0xff]
    %v152 = vld [vmem:[%s3 + $0x40] sm:$0xff]
    %v153 = vld [vmem:[%s3 + $0x48] sm:$0xff]
    %v154 = vld [vmem:[%s3 + $0x50] sm:$0xff]
    %v155 = vld [vmem:[%s3 + $0x58] sm:$0xff]
    %v156 = vld [vmem:[%s3 + $0x60] sm:$0xff]
    %v157 = vld [vmem:[%s3 + $0x68] sm:$0xff]
    %v158 = vld [vmem:[%s3 + $0x70] sm:$0xff]
    %v159 = vld [vmem:[%s3 + $0x78] sm:$0xff]
    %v160 = vld [vmem:[%s4] sm:$0x1]
    %v162 = vperm.slane %v160, 0
    %164 = vmatpush.msra.mxu0 %v159
    %165 = vmatpush.msra.mxu0 %v158
    %166 = vmatpush.msra.mxu0 %v157
    %167 = vmatpush.msra.mxu0 %v156
    %168 = vmatpush.msra.mxu0 %v155
    %169 = vmatpush.msra.mxu0 %v154
    %170 = vmatpush.msra.mxu0 %v153
    %171 = vmatpush.msra.mxu0 %v152
    %172 = vmatpush.msra.mxu0 %v151
    %173 = vmatpush.msra.mxu0 %v150
    %174 = vmatpush.msra.mxu0 %v149
    %175 = vmatpush.msra.mxu0 %v148
    %176 = vmatpush.msra.mxu0 %v147
    %177 = vmatpush.msra.mxu0 %v146
    %178 = vmatpush.msra.mxu0 %v145
    %179 = vmatpush.msra.mxu0 %v144
    %180 = vmatmul.f32.gmra.mxu0 %v131
    %v181 = vpop.f32.mrf.mxu0
    %v182 = vadd.f32 %v162, %v181
    %183 = vmatmul.f32.gmra.mxu0 %v132
    %v184 = vpop.f32.mrf.mxu0
    %v185 = vadd.f32 %v162, %v184
    %186 = vmatmul.f32.gmra.mxu0 %v133
    %v187 = vpop.f32.mrf.mxu0
    %v188 = vadd.f32 %v162, %v187
    %189 = vmatmul.f32.gmra.mxu0 %v134
    %v190 = vpop.f32.mrf.mxu0
    %v191 = vadd.f32 %v162, %v190
    %192 = vmatmul.f32.gmra.mxu0 %v135
    %v193 = vpop.f32.mrf.mxu0
    %v194 = vadd.f32 %v162, %v193
    %195 = vmatmul.f32.gmra.mxu0 %v136
    %v196 = vpop.f32.mrf.mxu0
    %v197 = vadd.f32 %v162, %v196
    %198 = vmatmul.f32.gmra.mxu0 %v137
    %v199 = vpop.f32.mrf.mxu0
    %v200 = vadd.f32 %v162, %v199
    %201 = vmatmul.f32.gmra.mxu0 %v138
    %v202 = vpop.f32.mrf.mxu0
    %v203 = vadd.f32 %v162, %v202
    %204 = vmatmul.f32.gmra.mxu0 %v139
    %v205 = vpop.f32.mrf.mxu0
    %v206 = vadd.f32 %v162, %v205
    %207 = vmatmul.f32.gmra.mxu0 %v140
    %v208 = vpop.f32.mrf.mxu0
    %v209 = vadd.f32 %v162, %v208
    %210 = vmatmul.f32.gmra.mxu0 %v141
    %v211 = vpop.f32.mrf.mxu0
    %v212 = vadd.f32 %v162, %v211
    %213 = vmatmul.f32.gmra.mxu0 %v142
    %v214 = vpop.f32.mrf.mxu0
    %v215 = vadd.f32 %v162, %v214
    %216 = vmatmul.f32.gmra.mxu0 %v143
    %v217 = vpop.f32.mrf.mxu0
    %v218 = vadd.f32 %v162, %v217
    %219 = vdwg.mxu0
    %v220 = vmax.f32 %v182, 0.0
    %v221 = vmax.f32 %v185, 0.0
    %v222 = vmax.f32 %v188, 0.0
    %v223 = vmax.f32 %v191, 0.0
    %v224 = vmax.f32 %v194, 0.0
    %v225 = vmax.f32 %v197, 0.0
    %v226 = vmax.f32 %v200, 0.0
    %v227 = vmax.f32 %v203, 0.0
    %v228 = vmax.f32 %v206, 0.0
    %v229 = vmax.f32 %v209, 0.0
    %v230 = vmax.f32 %v212, 0.0
    %v231 = vmax.f32 %v215, 0.0
    %v232 = vmax.f32 %v218, 0.0
    %v233 = vld [vmem:[#allocation2] sm:$0xff]
    %v234 = vld [vmem:[#allocation2 + $0x8] sm:$0xff]
    %v235 = vld [vmem:[#allocation2 + $0x10] sm:$0xff]
    %v236 = vld [vmem:[#allocation2 + $0x18] sm:$0xff]
    %v237 = vld [vmem:[#allocation2 + $0x20] sm:$0xff]
    %v238 = vld [vmem:[#allocation2 + $0x28] sm:$0xff]
    %v239 = vld [vmem:[#allocation2 + $0x30] sm:$0xff]
    %v240 = vld [vmem:[#allocation2 + $0x38] sm:$0xff]
    %v241 = vld [vmem:[#allocation2 + $0x40] sm:$0xff]
    %v242 = vld [vmem:[#allocation2 + $0x48] sm:$0xff]
    %v243 = vld [vmem:[#allocation2 + $0x50] sm:$0xff]
    %v244 = vld [vmem:[#allocation2 + $0x58] sm:$0xff]
    %v245 = vld [vmem:[#allocation2 + $0x60] sm:$0xff]
    %v246 = vld [vmem:[#allocation2 + $0x68] sm:$0xff]
    %v247 = vld [vmem:[#allocation2 + $0x70] sm:$0xff]
    %v248 = vld [vmem:[#allocation2 + $0x78] sm:$0xff]
    %v249 = vld [vmem:[%s6] sm:$0x1]
    %v251 = vperm.slane %v249, 0
    %253 = vmatpush.msra.mxu0 %v248
    %254 = vmatpush.msra.mxu0 %v247
    %255 = vmatpush.msra.mxu0 %v246
    %256 = vmatpush.msra.mxu0 %v245
    %257 = vmatpush.msra.mxu0 %v244
    %258 = vmatpush.msra.mxu0 %v243
    %259 = vmatpush.msra.mxu0 %v242
    %260 = vmatpush.msra.mxu0 %v241
    %261 = vmatpush.msra.mxu0 %v240
    %262 = vmatpush.msra.mxu0 %v239
    %263 = vmatpush.msra.mxu0 %v238
    %264 = vmatpush.msra.mxu0 %v237
    %265 = vmatpush.msra.mxu0 %v236
    %266 = vmatpush.msra.mxu0 %v235
    %267 = vmatpush.msra.mxu0 %v234
    %268 = vmatpush.msra.mxu0 %v233
    %269 = vmatmul.f32.gmra.mxu0 %v220
    %v270 = vpop.f32.mrf.mxu0
    %v271 = vadd.f32 %v251, %v270
    %272 = vmatmul.f32.gmra.mxu0 %v221
    %v273 = vpop.f32.mrf.mxu0
    %v274 = vadd.f32 %v251, %v273
    %275 = vmatmul.f32.gmra.mxu0 %v222
    %v276 = vpop.f32.mrf.mxu0
    %v277 = vadd.f32 %v251, %v276
    %278 = vmatmul.f32.gmra.mxu0 %v223
    %v279 = vpop.f32.mrf.mxu0
    %v280 = vadd.f32 %v251, %v279
    %281 = vmatmul.f32.gmra.mxu0 %v224
    %v282 = vpop.f32.mrf.mxu0
    %v283 = vadd.f32 %v251, %v282
    %284 = vmatmul.f32.gmra.mxu0 %v225
    %v285 = vpop.f32.mrf.mxu0
    %v286 = vadd.f32 %v251, %v285
    %287 = vmatmul.f32.gmra.mxu0 %v226
    %v288 = vpop.f32.mrf.mxu0
    %v289 = vadd.f32 %v251, %v288
    %290 = vmatmul.f32.gmra.mxu0 %v227
    %v291 = vpop.f32.mrf.mxu0
    %v292 = vadd.f32 %v251, %v291
    %293 = vmatmul.f32.gmra.mxu0 %v228
    %v294 = vpop.f32.mrf.mxu0
    %v295 = vadd.f32 %v251, %v294
    %296 = vmatmul.f32.gmra.mxu0 %v229
    %v297 = vpop.f32.mrf.mxu0
    %v298 = vadd.f32 %v251, %v297
    %299 = vmatmul.f32.gmra.mxu0 %v230
    %v300 = vpop.f32.mrf.mxu0
    %v301 = vadd.f32 %v251, %v300
    %302 = vmatmul.f32.gmra.mxu0 %v231
    %v303 = vpop.f32.mrf.mxu0
    %v304 = vadd.f32 %v251, %v303
    %305 = vmatmul.f32.gmra.mxu0 %v232
    %v306 = vpop.f32.mrf.mxu0
    %v307 = vadd.f32 %v251, %v306
    %308 = vdwg.mxu0
    %309 = vst [vmem:[%s7] sm:$0xff] %v271
    %310 = vst [vmem:[%s7 + $0x8] sm:$0xff] %v274
    %311 = vst [vmem:[%s7 + $0x10] sm:$0xff] %v277
    %312 = vst [vmem:[%s7 + $0x18] sm:$0xff] %v280
    %313 = vst [vmem:[%s7 + $0x20] sm:$0xff] %v283
    %314 = vst [vmem:[%s7 + $0x28] sm:$0xff] %v286
    %315 = vst [vmem:[%s7 + $0x30] sm:$0xff] %v289
    %316 = vst [vmem:[%s7 + $0x38] sm:$0xff] %v292
    %317 = vst [vmem:[%s7 + $0x40] sm:$0xff] %v295
    %318 = vst [vmem:[%s7 + $0x48] sm:$0xff] %v298
    %319 = vst [vmem:[%s7 + $0x50] sm:$0xff] %v301
    %320 = vst [vmem:[%s7 + $0x58] sm:$0xff] %v304
    %321 = vst [vmem:[%s7 + $0x60] sm:$0xff] %v307
    // Predicated region
    $region34: #{_net_relu_forward.1} parent=1 // pred_check
      _
    $region35: #{_net_relu_forward.1} parent=1 // pred_check_branch
      %323 = sbr.rel (0) target = $region37
    $region36: #{_net_relu_forward.1} parent=1 // pred_region
      _
    $region37: #{_net_relu_forward.1} parent=1 // pred_fallthru
      _
    // Predicated region
    $region38: #{_net_relu_forward.1} parent=1 // pred_check
      _
    $region39: #{_net_relu_forward.1} parent=1 // pred_check_branch
      %325 = sbr.rel (0) target = $region41
    $region40: #{_net_relu_forward.1} parent=1 // pred_region
      _
    $region41: #{_net_relu_forward.1} parent=1 // pred_fallthru
      _
    %326 = vsyncpa [#allocation3], 1

</llo_original>
